<compile_context>
chip_gen: v5e
topology: v5e:2x2
jax: 0.10.0
libtpu: 0.0.40
codegen_flags: <defaults>
</compile_context>

<pallas_src>
import functools
import math

import jax
import jax.numpy as jnp
from jax.experimental import pallas as pl
from jax.experimental.pallas import tpu as pltpu


# ---------------------------------------------------------------------------
# Kernels
# ---------------------------------------------------------------------------

def _scores(q_ref, k_ref, scale, clamp):
    # Fold the 1/sqrt(D) scale into the (small) q tile: TQ*D multiplies instead of a
    # full pass over the (TQ, Lk) f32 score buffer; stays in q's stored dtype (weak
    # scalar), exactly like the PyTorch module's `q = q / sqrt(D)`.
    qs = q_ref[...] * scale
    s = jax.lax.dot_general(
        qs, k_ref[...],
        dimension_numbers=(((2,), (2,)), ((0,), (0,))),
        preferred_element_type=jnp.float32)
    if clamp is not None:
        c = jnp.float32(abs(clamp))
        s = jnp.clip(s, -c, c)
    return s


def _softmax_store(s, o_ref, precise):
    s_max = jnp.max(s, axis=-1, keepdims=True)
    e = jnp.exp(s - s_max)
    denom = jnp.sum(e, axis=-1, keepdims=True)
    if precise:
        out = e / denom
    else:
        out = e * pl.reciprocal(denom, approx=True)   # EUP slot, effectively free
    o_ref[...] = out.astype(o_ref.dtype)


def _sdpa_kernel_nomask(q_ref, k_ref, o_ref, *, scale, clamp, precise):
    _softmax_store(_scores(q_ref, k_ref, scale, clamp), o_ref, precise)


def _sdpa_kernel_masked(q_ref, k_ref, m_ref, o_ref, *, scale, clamp, precise):
    s = _scores(q_ref, k_ref, scale, clamp)
    # m_ref block is (1|HB, 1|TQ, Lk) int8; broadcasting against (HB, TQ, Lk) scores.
    s = jnp.where(m_ref[...] != 0, jnp.float32(-1e16), s)
    _softmax_store(s, o_ref, precise)


# ---------------------------------------------------------------------------
# VMEM budget & tile planning
# ---------------------------------------------------------------------------

def _round_up(x, m):
    return ((x + m - 1) // m) * m


def _vmem_capacity_bytes():
    try:
        info = pltpu.get_tpu_info()
        cap = int(getattr(info, "vmem_capacity_bytes", 0) or 0)
        if cap > 0:
            return cap
    except Exception:
        pass
    return 64 << 20   # conservative fallback: smallest per-core VMEM (v7x)


def _vmem_budget(cap):
    # Working-set budget for double-buffered blocks + f32 temporaries.
    if cap <= (64 << 20):          # v7x: 64 MiB / TensorCore
        return 28 << 20
    return 96 << 20                # v5e / v6e: 128 MiB


def _plan_tiles(pack_base, Lq, Lk, D, q_bytes, o_bytes,
                has_mask, mask_per_row, mask_per_q, budget, force_tq=None):
    """Pick (HB heads per block, TQ query tile, padded Lq, estimated VMEM bytes)."""

    def step_bytes(hb, tq):
        b = 2 * hb * tq * D * q_bytes            # q block, double-buffered
        b += 2 * hb * Lk * D * q_bytes           # k block, double-buffered
        b += 2 * hb * tq * Lk * o_bytes          # out block, double-buffered
        b += 2 * hb * tq * Lk * 4                # f32 scores + exp temporary
        if has_mask:
            mr = hb if mask_per_row else 1
            mq = tq if mask_per_q else 1
            b += 2 * mr * mq * Lk                # int8 mask block
        return b

    if force_tq is not None:
        TQ = int(force_tq)
    else:
        cands = []
        if Lq <= 1024:
            cands.append(Lq)                     # whole-Lq block (no padding at all)
        for t in (1024, 512, 256, 128):
            if t < Lq and t not in cands:
                cands.append(t)
        fitting = [t for t in cands if step_bytes(1, t) <= budget]
        if not fitting:
            # Even the smallest tile exceeds the budget (extremely long Lk).
            # TODO(synk): add a third grid axis over Lk ("arbitrary") with an
            # online-softmax / two-pass scheme so the (TQ, Lk) f32 score block never
            # has to be resident whole.
            fitting = [min(cands)]
        # Minimize wasted (padded) query rows first, then prefer the larger tile.
        TQ = min(fitting, key=lambda t: (_round_up(Lq, t), -t))

    Lq_pad = Lq if TQ == Lq else _round_up(Lq, TQ)

    HB = 1
    if TQ <= 256:
        # Short query tiles: pack heads per grid step to amortize the ~0.35 us
        # per-step overhead and keep the MXU / store pipeline fed; cap is the same
        # per-generation VMEM budget (so it scales with the chip).
        for hb in range(pack_base, 0, -1):
            if pack_base % hb:
                continue
            if step_bytes(hb, TQ) <= budget:
                HB = hb
                break
    return HB, TQ, Lq_pad, step_bytes(HB, TQ)


# ---------------------------------------------------------------------------
# Mask handling (broadcast-aware; never replicated in HBM)
# ---------------------------------------------------------------------------

def _prep_mask(mask, B, H, Lq, Lk):
    m = jnp.asarray(mask)
    if m.ndim > 4:
        raise ValueError(f"mask rank {m.ndim} not supported")
    m = m.reshape((1,) * (4 - m.ndim) + m.shape)
    mb, mh, mq, mk = m.shape
    if mb not in (1, B) or mh not in (1, H) or mq not in (1, Lq) or mk not in (1, Lk):
        raise ValueError(f"mask shape {m.shape} not broadcastable to {(B, H, Lq, Lk)}")
    # Truthiness semantics (matches torch.masked_fill_): any nonzero value masks.
    m = (m != 0).astype(jnp.int8)
    if mk == 1:
        m = jnp.broadcast_to(m, (mb, mh, mq, Lk))
    if mb == 1 and mh == 1:
        kind = "scalar"          # broadcast over batch and heads
    elif mh == 1:
        kind = "batch"           # per-batch, broadcast over heads
    elif mb == 1:
        kind = "head"            # per-head, broadcast over batch
    else:
        kind = "flat"            # full (B, H, ...) mask
    return m, kind, (mq != 1)


def _mask_operand_and_spec(m4, kind, per_q, B, H, HB, TQ, Lk):
    mq = m4.shape[2]
    qdim = TQ if per_q else 1

    def qidx(j):
        return j if per_q else 0

    if kind == "flat":
        mf = m4.reshape(B * H, mq, Lk)
        spec = pl.BlockSpec((HB, qdim, Lk), lambda i, j: (i, qidx(j), 0))
    elif kind == "batch":
        mf = m4.reshape(B, mq, Lk)
        spec = pl.BlockSpec((1, qdim, Lk), lambda i, j: ((i * HB) // H, qidx(j), 0))
    elif kind == "head":
        mf = m4.reshape(H, mq, Lk)
        nhb = H // HB
        spec = pl.BlockSpec((HB, qdim, Lk), lambda i, j: (i % nhb, qidx(j), 0))
    else:  # "scalar"
        mf = m4.reshape(1, mq, Lk)
        spec = pl.BlockSpec((1, qdim, Lk), lambda i, j: (0, qidx(j), 0))
    return mf, spec


# ---------------------------------------------------------------------------
# Public wrapper
# ---------------------------------------------------------------------------

def scaled_dot_product_attention(q, k, mask=None, clamp=None, attn_dropout=0.0,
                                 out_dtype=None, precise_softmax=False,
                                 _force_tq=None):
    """Pallas TPU forward of ScaledDotProductAttention.

    q, k: [B, H, L, D] (or [H, L, D] for the 3-D path).
    mask: optional, broadcastable to [B, H, Lq, Lk]; truthy positions -> -1e16.
    out_dtype: optional override (e.g. jnp.bfloat16) to halve the dominant HBM
               writeback; defaults to q.dtype (module semantics).
    precise_softmax: use exact division instead of the approximate EUP reciprocal.
    """
    # TODO(synk): train-mode attention dropout (attn_dropout > 0) is not implemented.
    assert attn_dropout == 0.0, "only inference (attn_dropout == 0.0) is supported"

    if q.ndim == 3:  # 'hqd,hkd->hqk' path
        out = scaled_dot_product_attention(
            q[None], k[None], mask=mask, clamp=clamp, out_dtype=out_dtype,
            precise_softmax=precise_softmax, _force_tq=_force_tq)
        return out[0]

    assert q.ndim == 4 and k.ndim == 4, "expected [B, H, L, D] inputs"
    B, H, Lq, D = q.shape
    Bk, Hk, Lk, Dk = k.shape
    assert (Bk, Hk, Dk) == (B, H, D), "q/k batch, heads, head-dim must match"
    if k.dtype != q.dtype:
        k = k.astype(q.dtype)

    scale = 1.0 / math.sqrt(D)
    out_dtype = jnp.dtype(out_dtype) if out_dtype is not None else jnp.dtype(q.dtype)
    BH = B * H

    # ---- mask canonicalization -------------------------------------------------
    if mask is not None:
        m4, mkind, mask_per_q = _prep_mask(mask, B, H, Lq, Lk)
    else:
        m4, mkind, mask_per_q = None, None, False
    mask_per_row = mkind in ("flat", "head")
    # Head blocks must not cross batch boundaries when the mask is only per-batch or
    # only per-head; otherwise we may pack across the whole flattened B*H axis.
    pack_base = H if mkind in ("batch", "head") else BH

    # ---- per-generation VMEM budget & tile planning -----------------------------
    cap = _vmem_capacity_bytes()
    budget = _vmem_budget(cap)
    q_bytes = jnp.dtype(q.dtype).itemsize
    o_bytes = out_dtype.itemsize
    HB, TQ, Lq_pad, est_bytes = _plan_tiles(
        pack_base, Lq, Lk, D, q_bytes, o_bytes,
        mask is not None, mask_per_row, mask_per_q, budget, force_tq=_force_tq)

    # ---- pad Lq so the query tile divides it (padded rows sliced off afterwards) --
    if Lq_pad != Lq:
        q = jnp.pad(q, ((0, 0), (0, 0), (0, Lq_pad - Lq), (0, 0)))
        if m4 is not None and mask_per_q:
            m4 = jnp.pad(m4, ((0, 0), (0, 0), (0, Lq_pad - Lq), (0, 0)))

    qf = jnp.reshape(q, (BH, Lq_pad, D))
    kf = jnp.reshape(k, (BH, Lk, D))

    grid = (BH // HB, Lq_pad // TQ)

    q_spec = pl.BlockSpec((HB, TQ, D), lambda i, j: (i, j, 0))
    k_spec = pl.BlockSpec((HB, Lk, D), lambda i, j: (i, 0, 0))
    o_spec = pl.BlockSpec((HB, TQ, Lk), lambda i, j: (i, j, 0))

    if mask is None:
        kernel = functools.partial(_sdpa_kernel_nomask, scale=scale, clamp=clamp,
                                   precise=precise_softmax)
        in_specs = [q_spec, k_spec]
        operands = (qf, kf)
    else:
        mf, m_spec = _mask_operand_and_spec(m4, mkind, mask_per_q, B, H, HB, TQ, Lk)
        kernel = functools.partial(_sdpa_kernel_masked, scale=scale, clamp=clamp,
                                   precise=precise_softmax)
        in_specs = [q_spec, k_spec, m_spec]
        operands = (qf, kf, mf)

    # VMEM limit derived from the actual accounting (incl. the f32 score/exp temps),
    # capped safely below the physical per-core VMEM of this generation.
    vmem_limit = int(min(max(est_bytes + (8 << 20), 32 << 20), cap - (8 << 20)))

    # Pin megacore sharding to the head-block axis so each TensorCore keeps its K
    # block resident across all q-tiles of a head (v7x); no-op on v5e/v6e. Only split
    # the q-tile axis when there is a single head block.
    if grid[0] == 1 and grid[1] > 1:
        dims = ("arbitrary", "parallel")
    else:
        dims = ("parallel", "arbitrary")

    out = pl.pallas_call(
        kernel,
        out_shape=jax.ShapeDtypeStruct((BH, Lq_pad, Lk), out_dtype),
        grid_spec=pltpu.PrefetchScalarGridSpec(
            num_scalar_prefetch=0,
            grid=grid,
            in_specs=in_specs,
            out_specs=o_spec,
        ),
        compiler_params=pltpu.CompilerParams(
            dimension_semantics=dims,
            vmem_limit_bytes=vmem_limit,
        ),
    )(*operands)

    out = out.reshape(B, H, Lq_pad, Lk)
    if Lq_pad != Lq:
        out = out[:, :, :Lq, :]
    return out


# ---------------------------------------------------------------------------
# Self-test
# ---------------------------------------------------------------------------

if __name__ == "__main__":
    key = jax.random.PRNGKey(0)
    kq, kk, km, kq2, kk2, km2 = jax.random.split(key, 6)

    def ref_attn(q, k, mask=None, clamp=None):
        s = jnp.einsum("bhqd,bhkd->bhqk",
                       q / jnp.sqrt(jnp.float32(q.shape[-1])), k)
        if clamp is not None:
            s = jnp.clip(s, -abs(clamp), abs(clamp))
        if mask is not None:
            s = jnp.where(mask != 0, jnp.float32(-1e16), s)
        return jax.nn.softmax(s, axis=-1)

    def close(a, b, tol=2e-3):
        return bool(jnp.allclose(a, b, atol=tol, rtol=tol))

    ok = True

    B, H, Lq, Lk, D = 2, 4, 8, 8, 32
    q = jax.random.normal(kq, (B, H, Lq, D), dtype=jnp.float32)
    k = jax.random.normal(kk, (B, H, Lk, D), dtype=jnp.float32)

    # 1) per-head boolean mask (B, H, Lq, Lk)
    mask = jax.random.bernoulli(km, p=0.25, shape=(B, H, Lq, Lk))
    attn = jax.block_until_ready(scaled_dot_product_attention(q, k, mask=mask))
    ok &= close(attn, ref_attn(q, k, mask=mask))

    # 2) mask broadcast over heads (B, 1, Lq, Lk)
    mask_b = mask[:, :1]
    attn_b = jax.block_until_ready(scaled_dot_product_attention(q, k, mask=mask_b))
    ok &= close(attn_b, ref_attn(q, k, mask=mask_b))

    # 3) float-valued mask broadcast over batch and heads (1, 1, Lq, Lk)
    mask_f = mask[:1, :1].astype(jnp.float32) * 0.7
    attn_f = jax.block_until_ready(scaled_dot_product_attention(q, k, mask=mask_f))
    ok &= close(attn_f, ref_attn(q, k, mask=mask_f))

    # 4) no mask, with clamp -> no-mask kernel variant
    attn_c = jax.block_until_ready(scaled_dot_product_attention(q, k, clamp=0.5))
    ok &= close(attn_c, ref_attn(q, k, clamp=0.5))

    # 5) 3-D ('hqd,hkd->hqk') path
    attn_3 = jax.block_until_ready(scaled_dot_product_attention(q[0], k[0]))
    ok &= close(attn_3, ref_attn(q[:1], k[:1])[0])

    # 6) Lq not a multiple of the query tile (forced TQ=128 -> exercises padding,
    #    q-tiling and a per-head mask broadcast over batch)
    B2, H2, Lq2, Lk2, D2 = 1, 2, 200, 160, 32
    q2 = jax.random.normal(kq2, (B2, H2, Lq2, D2), dtype=jnp.float32)
    k2 = jax.random.normal(kk2, (B2, H2, Lk2, D2), dtype=jnp.float32)
    mask2 = jax.random.bernoulli(km2, p=0.25, shape=(H2, Lq2, Lk2))
    attn2 = jax.block_until_ready(
        scaled_dot_product_attention(q2, k2, mask=mask2, _force_tq=128))
    ok &= close(attn2, ref_attn(q2, k2, mask=mask2))

    assert ok, "mismatch vs plain-JAX reference"
    print("KERNEL_OK")
</pallas_src>

<mosaic_0001>
module attributes {stable_mosaic.version = 11 : i64} {
  func.func @_sdpa_kernel_masked(%arg0: i32, %arg1: i32, %arg2: memref<8x8x32xf32, #tpu.memory_space<vmem>>, %arg3: memref<8x8x32xf32, #tpu.memory_space<vmem>>, %arg4: memref<8x8x8xi8, #tpu.memory_space<vmem>>, %arg5: memref<8x8x8xf32, #tpu.memory_space<vmem>>) attributes {dimension_semantics = [#tpu.dimension_semantics<parallel>, #tpu.dimension_semantics<arbitrary>], iteration_bounds = array<i64: 1, 1>, scalar_prefetch = 0 : i64, scratch_operands = 0 : i64, tpu.core_type = #tpu.core_type<tc>, window_params = [{transform_indices = @transform_0, window_bounds = array<i64: 8, 8, 32>}, {transform_indices = @transform_1, window_bounds = array<i64: 8, 8, 32>}, {transform_indices = @transform_2, window_bounds = array<i64: 8, 8, 8>}, {transform_indices = @transform_3, window_bounds = array<i64: 8, 8, 8>}]} {
    %c0 = arith.constant 0 : index
    %c0_0 = arith.constant 0 : index
    %c0_1 = arith.constant 0 : index
    %0 = vector.load %arg2[%c0, %c0_0, %c0_1] : memref<8x8x32xf32, #tpu.memory_space<vmem>>, vector<8x8x32xf32>
    %cst = arith.constant 0.176776692 : f32
    %1 = vector.broadcast %cst : f32 to vector<8x8x32xf32>
    %2 = arith.mulf %0, %1 : vector<8x8x32xf32>
    %c0_2 = arith.constant 0 : index
    %c0_3 = arith.constant 0 : index
    %c0_4 = arith.constant 0 : index
    %3 = vector.load %arg3[%c0_2, %c0_3, %c0_4] : memref<8x8x32xf32, #tpu.memory_space<vmem>>, vector<8x8x32xf32>
    %cst_5 = arith.constant dense<0.000000e+00> : vector<8x8x8xf32>
    %4 = tpu.matmul %2, %3, %cst_5 {dimension_numbers = #tpu.dot_dimension_numbers<[2], [2], [1], [1], [0, 0, 0, 1, 1, 1], [0], [0]>} : vector<8x8x32xf32>, vector<8x8x32xf32>, vector<8x8x8xf32> -> vector<8x8x8xf32>
    %c0_6 = arith.constant 0 : index
    %c0_7 = arith.constant 0 : index
    %c0_8 = arith.constant 0 : index
    %5 = vector.load %arg4[%c0_6, %c0_7, %c0_8] : memref<8x8x8xi8, #tpu.memory_space<vmem>>, vector<8x8x8xi8>
    %c0_i8 = arith.constant 0 : i8
    %6 = vector.broadcast %c0_i8 : i8 to vector<8x8x8xi8>
    %7 = arith.cmpi ne, %5, %6 : vector<8x8x8xi8>
    %cst_9 = arith.constant -1.000000e+16 : f32
    %8 = vector.broadcast %cst_9 : f32 to vector<8x8x8xf32>
    %9 = arith.select %7, %8, %4 : vector<8x8x8xi1>, vector<8x8x8xf32>
    %cst_10 = arith.constant dense<0xFF800000> : vector<8x8xf32>
    %10 = vector.multi_reduction <maximumf>, %9, %cst_10 [2] : vector<8x8x8xf32> to vector<8x8xf32>
    %11 = vector.shape_cast %10 : vector<8x8xf32> to vector<8x8x1xf32>
    %12 = vector.broadcast %11 : vector<8x8x1xf32> to vector<8x8x8xf32>
    %13 = arith.subf %9, %12 : vector<8x8x8xf32>
    %14 = math.exp %13 : vector<8x8x8xf32>
    %cst_11 = arith.constant dense<0.000000e+00> : vector<8x8xf32>
    %15 = vector.multi_reduction <add>, %14, %cst_11 [2] : vector<8x8x8xf32> to vector<8x8xf32>
    %16 = vector.shape_cast %15 : vector<8x8xf32> to vector<8x8x1xf32>
    %17 = tpu.reciprocal %16 {approx = true} : vector<8x8x1xf32> -> vector<8x8x1xf32>
    %18 = vector.broadcast %17 : vector<8x8x1xf32> to vector<8x8x8xf32>
    %19 = arith.mulf %14, %18 : vector<8x8x8xf32>
    %c0_12 = arith.constant 0 : index
    %c0_13 = arith.constant 0 : index
    %c0_14 = arith.constant 0 : index
    %20 = vector.load %arg5[%c0_12, %c0_13, %c0_14] : memref<8x8x8xf32, #tpu.memory_space<vmem>>, vector<8x8x8xf32>
    tpu.vector_store %arg5[%c0_12, %c0_13, %c0_14], %19 {strides = array<i32>} : memref<8x8x8xf32, #tpu.memory_space<vmem>>, vector<8x8x8xf32>,
    return
  }
  func.func @transform_0(%arg0: i32, %arg1: i32) -> (i32, i32, i32) {
    %c0_i32 = arith.constant 0 : i32
    %c0_i32_0 = arith.constant 0 : i32
    return %arg0, %arg1, %c0_i32 : i32, i32, i32
  }
  func.func @transform_1(%arg0: i32, %arg1: i32) -> (i32, i32, i32) {
    %c0_i32 = arith.constant 0 : i32
    %c0_i32_0 = arith.constant 0 : i32
    %c0_i32_1 = arith.constant 0 : i32
    return %arg0, %c0_i32, %c0_i32_0 : i32, i32, i32
  }
  func.func @transform_2(%arg0: i32, %arg1: i32) -> (i32, i32, i32) {
    %c0_i32 = arith.constant 0 : i32
    %c0_i32_0 = arith.constant 0 : i32
    return %arg0, %arg1, %c0_i32 : i32, i32, i32
  }
  func.func @transform_3(%arg0: i32, %arg1: i32) -> (i32, i32, i32) {
    %c0_i32 = arith.constant 0 : i32
    %c0_i32_0 = arith.constant 0 : i32
    return %arg0, %arg1, %c0_i32 : i32, i32, i32
  }
}

</mosaic_0001>

<llo_original>
// kernel: tpu_custom_call.1
$region0: #{tpu_custom_call.1}
  #allocation0 [shape = 'u32[]', space=smem, size = 0x4, offset = 0x4, fixed_abs, tag = 'smem constant byte address 0x4 - core index']
  #allocation1 [shape = 'u32[72,128]{1,0:T(1,128)}', space=vmem, size = 0x9000, scoped, tag = 'internal scratch']
  %s0 = inlined_call_operand.hbm [shape: f32[8,8,32], index: 0, kind: input, shape index: {}]
  %s1 = inlined_call_operand.hbm [shape: f32[8,8,32], index: 1, kind: input, shape index: {}]
  %s2 = inlined_call_operand.hbm [shape: s8[8,8,8], index: 2, kind: input, shape index: {}]
  %s3 = inlined_call_operand.hbm [shape: f32[8,8,8], index: 3, kind: output, shape index: {}]
  %s4 = sld [smem:[#allocation0]]
  $region34: #{tpu_custom_call.1} parent=0
    _
  %s6 = ssub.s32 1, %s4
  %s7 = scalar_select 0, %s6, %s4
  $region1: #{tpu_custom_call.1} parent=0
    #allocation2 [shape = 'u8[32768]{0}', space=vmem, size = 0x8000, scoped, tag = 'input window, operand 0, single buffered']
    #allocation3 [shape = 's32[1]{0}', space=sflag, size = 0x4, scoped, tag = 'scoped memory for tpu_custom_call.1']
    #allocation4 [shape = 's32[1]{0}', space=sflag, size = 0x4, scoped, tag = 'scoped memory for tpu_custom_call.1']
    #allocation5 [shape = 'u8[32768]{0}', space=vmem, size = 0x8000, scoped, tag = 'input window, operand 1, single buffered']
    #allocation6 [shape = 's32[1]{0}', space=sflag, size = 0x4, scoped, tag = 'scoped memory for tpu_custom_call.1']
    #allocation7 [shape = 'u8[8192]{0}', space=vmem, size = 0x2000, scoped, tag = 'input window, operand 2, single buffered']
    #allocation8 [shape = 'u8[32768]{0}', space=vmem, size = 0x8000, scoped, tag = 'output window, operand 0, single buffered']
    %8 = vsyncpa [#allocation3], 0
    %9 = vsyncpa [#allocation6], 0
    %10 = vsyncpa [#allocation4], 0
    // Predicated region
    $region2: #{tpu_custom_call.1} parent=1 // pred_check
      _
    $region3: #{tpu_custom_call.1} parent=1 // pred_check_branch
      %12 = sbr.rel (0) target = $region5
    $region4: #{tpu_custom_call.1} parent=1 // pred_region
      %14 = vsyncadd [#allocation3], 0
      %s15 = sshll.u32 %s0, 4
      %s16 = int_to_ptr.hbm [resolvable:$true] %s15
      %s17 = sshll.u32 [#allocation2], 4
      %s18 = int_to_ptr.vmem [resolvable:$true] %s17
      %23 = dma.hbm_to_vmem [thread:$0]  %s16, 1024, %s18, [#allocation3], 128, 128, 8
    $region5: #{tpu_custom_call.1} parent=1 // pred_fallthru
      _
    // Predicated region
    $region6: #{tpu_custom_call.1} parent=1 // pred_check
      _
    $region7: #{tpu_custom_call.1} parent=1 // pred_check_branch
      %25 = sbr.rel (0) target = $region9
    $region8: #{tpu_custom_call.1} parent=1 // pred_region
      %27 = vsyncadd [#allocation6], 0
      %s28 = sshll.u32 %s1, 4
      %s29 = int_to_ptr.hbm [resolvable:$true] %s28
      %s30 = sshll.u32 [#allocation5], 4
      %s31 = int_to_ptr.vmem [resolvable:$true] %s30
      %36 = dma.hbm_to_vmem [thread:$0]  %s29, 1024, %s31, [#allocation6], 128, 128, 8
    $region9: #{tpu_custom_call.1} parent=1 // pred_fallthru
      _
    // Predicated region
    $region10: #{tpu_custom_call.1} parent=1 // pred_check
      _
    $region11: #{tpu_custom_call.1} parent=1 // pred_check_branch
      %38 = sbr.rel (0) target = $region13
    $region12: #{tpu_custom_call.1} parent=1 // pred_region
      %40 = vsyncadd [#allocation6], 0
      %s41 = sshll.u32 %s2, 4
      %s42 = int_to_ptr.hbm [resolvable:$true] %s41
      %s43 = sshll.u32 [#allocation7], 4
      %s44 = int_to_ptr.vmem [resolvable:$true] %s43
      %49 = dma.hbm_to_vmem [thread:$0]  %s42, 256, %s44, [#allocation6], 32, 32, 2
    $region13: #{tpu_custom_call.1} parent=1 // pred_fallthru
      _
    // Predicated region
    $region14: #{tpu_custom_call.1} parent=1 // pred_check
      _
    $region15: #{tpu_custom_call.1} parent=1 // pred_check_branch
      %51 = sbr.rel (0) target = $region17
    $region16: #{tpu_custom_call.1} parent=1 // pred_region
      %53 = dma.done [#allocation3], 1024
    $region17: #{tpu_custom_call.1} parent=1 // pred_fallthru
      _
    // Predicated region
    $region18: #{tpu_custom_call.1} parent=1 // pred_check
      _
    $region19: #{tpu_custom_call.1} parent=1 // pred_check_branch
      %55 = sbr.rel (0) target = $region21
    $region20: #{tpu_custom_call.1} parent=1 // pred_region
      %57 = dma.done [#allocation6], 1024
    $region21: #{tpu_custom_call.1} parent=1 // pred_fallthru
      _
    // Predicated region
    $region22: #{tpu_custom_call.1} parent=1 // pred_check
      _
    $region23: #{tpu_custom_call.1} parent=1 // pred_check_branch
      %59 = sbr.rel (0) target = $region25
    $region24: #{tpu_custom_call.1} parent=1 // pred_region
      %61 = dma.done [#allocation6], 256
    $region25: #{tpu_custom_call.1} parent=1 // pred_fallthru
      _
    %v64 = vld [vmem:[#allocation2] sm:$0xff]
    %v65 = vld [vmem:[#allocation2 + $0x8] sm:$0xff]
    %v66 = vld [vmem:[#allocation2 + $0x10] sm:$0xff]
    %v67 = vld [vmem:[#allocation2 + $0x18] sm:$0xff]
    %v68 = vld [vmem:[#allocation2 + $0x20] sm:$0xff]
    %v69 = vld [vmem:[#allocation2 + $0x28] sm:$0xff]
    %v70 = vld [vmem:[#allocation2 + $0x30] sm:$0xff]
    %v71 = vld [vmem:[#allocation2 + $0x38] sm:$0xff]
    %v72 = vmul.f32 %v64, 0.17677669
    %v73 = vmul.f32 %v65, 0.17677669
    %v74 = vmul.f32 %v66, 0.17677669
    %v75 = vmul.f32 %v67, 0.17677669
    %v76 = vmul.f32 %v68, 0.17677669
    %v77 = vmul.f32 %v69, 0.17677669
    %v78 = vmul.f32 %v70, 0.17677669
    %v79 = vmul.f32 %v71, 0.17677669
    %v80 = vld [vmem:[#allocation5] sm:$0xff]
    %v81 = vld [vmem:[#allocation5 + $0x8] sm:$0xff]
    %v82 = vld [vmem:[#allocation5 + $0x10] sm:$0xff]
    %v83 = vld [vmem:[#allocation5 + $0x18] sm:$0xff]
    %v84 = vld [vmem:[#allocation5 + $0x20] sm:$0xff]
    %v85 = vld [vmem:[#allocation5 + $0x28] sm:$0xff]
    %v86 = vld [vmem:[#allocation5 + $0x30] sm:$0xff]
    %v87 = vld [vmem:[#allocation5 + $0x38] sm:$0xff]
    %vm88 = vcmask 261120
    %v90 = vsel %vm88, %v72, 0
    %v93 = vsel %vm88, %v80, 0
    %95 = vmatpush.xpose.msra.mxu0 0.0
    %96 = vmatpush.xpose.msra.mxu0 0.0
    %97 = vmatpush.xpose.msra.mxu0 0.0
    %98 = vmatpush.xpose.msra.mxu0 0.0
    %99 = vmatpush.xpose.msra.mxu0 0.0
    %100 = vmatpush.xpose.msra.mxu0 0.0
    %101 = vmatpush.xpose.msra.mxu0 0.0
    %102 = vmatpush.xpose.msra.mxu0 0.0
    %103 = vmatpush.xpose.msra.mxu0 0.0
    %104 = vmatpush.xpose.msra.mxu0 0.0
    %105 = vmatpush.xpose.msra.mxu0 0.0
    %106 = vmatpush.xpose.msra.mxu0 0.0
    %107 = vmatpush.xpose.msra.mxu0 0.0
    %108 = vmatpush.xpose.msra.mxu0 0.0
    %109 = vmatpush.xpose.msra.mxu0 0.0
    %110 = vmatpush.xpose.msra.mxu0 %v93
    %111 = vmatmul.f32.gmra.mxu0 %v90
    %v112 = vpop.f32.mrf.mxu0
    %v113 = vadd.f32 0.0, %v112
    %114 = vdwg.mxu0
    %v116 = vsel %vm88, %v73, 0
    %v119 = vsel %vm88, %v81, 0
    %121 = vmatpush.xpose.msra.mxu0 0.0
    %122 = vmatpush.xpose.msra.mxu0 0.0
    %123 = vmatpush.xpose.msra.mxu0 0.0
    %124 = vmatpush.xpose.msra.mxu0 0.0
    %125 = vmatpush.xpose.msra.mxu0 0.0
    %126 = vmatpush.xpose.msra.mxu0 0.0
    %127 = vmatpush.xpose.msra.mxu0 0.0
    %128 = vmatpush.xpose.msra.mxu0 0.0
    %129 = vmatpush.xpose.msra.mxu0 0.0
    %130 = vmatpush.xpose.msra.mxu0 0.0
    %131 = vmatpush.xpose.msra.mxu0 0.0
    %132 = vmatpush.xpose.msra.mxu0 0.0
    %133 = vmatpush.xpose.msra.mxu0 0.0
    %134 = vmatpush.xpose.msra.mxu0 0.0
    %135 = vmatpush.xpose.msra.mxu0 0.0
    %136 = vmatpush.xpose.msra.mxu0 %v119
    %137 = vmatmul.f32.gmra.mxu0 %v116
    %v138 = vpop.f32.mrf.mxu0
    %v139 = vadd.f32 0.0, %v138
    %140 = vdwg.mxu0
    %v142 = vsel %vm88, %v74, 0
    %v145 = vsel %vm88, %v82, 0
    %147 = vmatpush.xpose.msra.mxu0 0.0
    %148 = vmatpush.xpose.msra.mxu0 0.0
    %149 = vmatpush.xpose.msra.mxu0 0.0
    %150 = vmatpush.xpose.msra.mxu0 0.0
    %151 = vmatpush.xpose.msra.mxu0 0.0
    %152 = vmatpush.xpose.msra.mxu0 0.0
    %153 = vmatpush.xpose.msra.mxu0 0.0
    %154 = vmatpush.xpose.msra.mxu0 0.0
    %155 = vmatpush.xpose.msra.mxu0 0.0
    %156 = vmatpush.xpose.msra.mxu0 0.0
    %157 = vmatpush.xpose.msra.mxu0 0.0
    %158 = vmatpush.xpose.msra.mxu0 0.0
    %159 = vmatpush.xpose.msra.mxu0 0.0
    %160 = vmatpush.xpose.msra.mxu0 0.0
    %161 = vmatpush.xpose.msra.mxu0 0.0
    %162 = vmatpush.xpose.msra.mxu0 %v145
    %163 = vmatmul.f32.gmra.mxu0 %v142
    %v164 = vpop.f32.mrf.mxu0
    %v165 = vadd.f32 0.0, %v164
    %166 = vdwg.mxu0
    %v168 = vsel %vm88, %v75, 0
    %v171 = vsel %vm88, %v83, 0
    %173 = vmatpush.xpose.msra.mxu0 0.0
    %174 = vmatpush.xpose.msra.mxu0 0.0
    %175 = vmatpush.xpose.msra.mxu0 0.0
    %176 = vmatpush.xpose.msra.mxu0 0.0
    %177 = vmatpush.xpose.msra.mxu0 0.0
    %178 = vmatpush.xpose.msra.mxu0 0.0
    %179 = vmatpush.xpose.msra.mxu0 0.0
    %180 = vmatpush.xpose.msra.mxu0 0.0
    %181 = vmatpush.xpose.msra.mxu0 0.0
    %182 = vmatpush.xpose.msra.mxu0 0.0
    %183 = vmatpush.xpose.msra.mxu0 0.0
    %184 = vmatpush.xpose.msra.mxu0 0.0
    %185 = vmatpush.xpose.msra.mxu0 0.0
    %186 = vmatpush.xpose.msra.mxu0 0.0
    %187 = vmatpush.xpose.msra.mxu0 0.0
    %188 = vmatpush.xpose.msra.mxu0 %v171
    %189 = vmatmul.f32.gmra.mxu0 %v168
    %v190 = vpop.f32.mrf.mxu0
    %v191 = vadd.f32 0.0, %v190
    %192 = vdwg.mxu0
    %v194 = vsel %vm88, %v76, 0
    %v197 = vsel %vm88, %v84, 0
    %199 = vmatpush.xpose.msra.mxu0 0.0
    %200 = vmatpush.xpose.msra.mxu0 0.0
    %201 = vmatpush.xpose.msra.mxu0 0.0
    %202 = vmatpush.xpose.msra.mxu0 0.0
    %203 = vmatpush.xpose.msra.mxu0 0.0
    %204 = vmatpush.xpose.msra.mxu0 0.0
    %205 = vmatpush.xpose.msra.mxu0 0.0
    %206 = vmatpush.xpose.msra.mxu0 0.0
    %207 = vmatpush.xpose.msra.mxu0 0.0
    %208 = vmatpush.xpose.msra.mxu0 0.0
    %209 = vmatpush.xpose.msra.mxu0 0.0
    %210 = vmatpush.xpose.msra.mxu0 0.0
    %211 = vmatpush.xpose.msra.mxu0 0.0
    %212 = vmatpush.xpose.msra.mxu0 0.0
    %213 = vmatpush.xpose.msra.mxu0 0.0
    %214 = vmatpush.xpose.msra.mxu0 %v197
    %215 = vmatmul.f32.gmra.mxu0 %v194
    %v216 = vpop.f32.mrf.mxu0
    %v217 = vadd.f32 0.0, %v216
    %218 = vdwg.mxu0
    %v220 = vsel %vm88, %v77, 0
    %v223 = vsel %vm88, %v85, 0
    %225 = vmatpush.xpose.msra.mxu0 0.0
    %226 = vmatpush.xpose.msra.mxu0 0.0
    %227 = vmatpush.xpose.msra.mxu0 0.0
    %228 = vmatpush.xpose.msra.mxu0 0.0
    %229 = vmatpush.xpose.msra.mxu0 0.0
    %230 = vmatpush.xpose.msra.mxu0 0.0
    %231 = vmatpush.xpose.msra.mxu0 0.0
    %232 = vmatpush.xpose.msra.mxu0 0.0
    %233 = vmatpush.xpose.msra.mxu0 0.0
    %234 = vmatpush.xpose.msra.mxu0 0.0
    %235 = vmatpush.xpose.msra.mxu0 0.0
    %236 = vmatpush.xpose.msra.mxu0 0.0
    %237 = vmatpush.xpose.msra.mxu0 0.0
    %238 = vmatpush.xpose.msra.mxu0 0.0
    %239 = vmatpush.xpose.msra.mxu0 0.0
    %240 = vmatpush.xpose.msra.mxu0 %v223
    %241 = vmatmul.f32.gmra.mxu0 %v220
    %v242 = vpop.f32.mrf.mxu0
    %v243 = vadd.f32 0.0, %v242
    %244 = vdwg.mxu0
    %v246 = vsel %vm88, %v78, 0
    %v249 = vsel %vm88, %v86, 0
    %251 = vmatpush.xpose.msra.mxu0 0.0
    %252 = vmatpush.xpose.msra.mxu0 0.0
    %253 = vmatpush.xpose.msra.mxu0 0.0
    %254 = vmatpush.xpose.msra.mxu0 0.0
    %255 = vmatpush.xpose.msra.mxu0 0.0
    %256 = vmatpush.xpose.msra.mxu0 0.0
    %257 = vmatpush.xpose.msra.mxu0 0.0
    %258 = vmatpush.xpose.msra.mxu0 0.0
    %259 = vmatpush.xpose.msra.mxu0 0.0
    %260 = vmatpush.xpose.msra.mxu0 0.0
    %261 = vmatpush.xpose.msra.mxu0 0.0
    %262 = vmatpush.xpose.msra.mxu0 0.0
    %263 = vmatpush.xpose.msra.mxu0 0.0
    %264 = vmatpush.xpose.msra.mxu0 0.0
    %265 = vmatpush.xpose.msra.mxu0 0.0
    %266 = vmatpush.xpose.msra.mxu0 %v249
    %267 = vmatmul.f32.gmra.mxu0 %v246
    %v268 = vpop.f32.mrf.mxu0
    %v269 = vadd.f32 0.0, %v268
    %270 = vdwg.mxu0
    %v272 = vsel %vm88, %v79, 0
    %v275 = vsel %vm88, %v87, 0
    %277 = vmatpush.xpose.msra.mxu0 0.0
    %278 = vmatpush.xpose.msra.mxu0 0.0
    %279 = vmatpush.xpose.msra.mxu0 0.0
    %280 = vmatpush.xpose.msra.mxu0 0.0
    %281 = vmatpush.xpose.msra.mxu0 0.0
    %282 = vmatpush.xpose.msra.mxu0 0.0
    %283 = vmatpush.xpose.msra.mxu0 0.0
    %284 = vmatpush.xpose.msra.mxu0 0.0
    %285 = vmatpush.xpose.msra.mxu0 0.0
    %286 = vmatpush.xpose.msra.mxu0 0.0
    %287 = vmatpush.xpose.msra.mxu0 0.0
    %288 = vmatpush.xpose.msra.mxu0 0.0
    %289 = vmatpush.xpose.msra.mxu0 0.0
    %290 = vmatpush.xpose.msra.mxu0 0.0
    %291 = vmatpush.xpose.msra.mxu0 0.0
    %292 = vmatpush.xpose.msra.mxu0 %v275
    %293 = vmatmul.f32.gmra.mxu0 %v272
    %v294 = vpop.f32.mrf.mxu0
    %v295 = vadd.f32 0.0, %v294
    %296 = vdwg.mxu0
    %v297 = vld [vmem:[#allocation7] sm:$0x3]
    %v298 = vld [vmem:[#allocation7 + $0x2] sm:$0x3]
    %v299 = vld [vmem:[#allocation7 + $0x4] sm:$0x3]
    %v300 = vld [vmem:[#allocation7 + $0x6] sm:$0x3]
    %v301 = vld [vmem:[#allocation7 + $0x8] sm:$0x3]
    %v302 = vld [vmem:[#allocation7 + $0xa] sm:$0x3]
    %v303 = vld [vmem:[#allocation7 + $0xc] sm:$0x3]
    %v304 = vld [vmem:[#allocation7 + $0xe] sm:$0x3]
    %vm305 = vnez %v297
    %vm306 = vnez %v298
    %vm307 = vnez %v299
    %vm308 = vnez %v300
    %vm309 = vnez %v301
    %vm310 = vnez %v302
    %vm311 = vnez %v303
    %vm312 = vnez %v304
    %v313 = vsel %vm305, 16843009, 0
    %v314 = vsel %vm306, 16843009, 0
    %v315 = vsel %vm307, 16843009, 0
    %v316 = vsel %vm308, 16843009, 0
    %v317 = vsel %vm309, 16843009, 0
    %v318 = vsel %vm310, 16843009, 0
    %v319 = vsel %vm311, 16843009, 0
    %v320 = vsel %vm312, 16843009, 0
    %v321 = vunpack.c.0.s8 %v313
    %v322 = vunpack.c.0.s8 %v314
    %v323 = vunpack.c.0.s8 %v315
    %v324 = vunpack.c.0.s8 %v316
    %v325 = vunpack.c.0.s8 %v317
    %v326 = vunpack.c.0.s8 %v318
    %v327 = vunpack.c.0.s8 %v319
    %v328 = vunpack.c.0.s8 %v320
    %vm329 = vcmp.ne.s32.totalorder %v321, 0
    %vm330 = vcmp.ne.s32.totalorder %v322, 0
    %vm331 = vcmp.ne.s32.totalorder %v323, 0
    %vm332 = vcmp.ne.s32.totalorder %v324, 0
    %vm333 = vcmp.ne.s32.totalorder %v325, 0
    %vm334 = vcmp.ne.s32.totalorder %v326, 0
    %vm335 = vcmp.ne.s32.totalorder %v327, 0
    %vm336 = vcmp.ne.s32.totalorder %v328, 0
    %v337 = vsel %vm329, -1e+16, %v113
    %v338 = vsel %vm330, -1e+16, %v139
    %v339 = vsel %vm331, -1e+16, %v165
    %v340 = vsel %vm332, -1e+16, %v191
    %v341 = vsel %vm333, -1e+16, %v217
    %v342 = vsel %vm334, -1e+16, %v243
    %v343 = vsel %vm335, -1e+16, %v269
    %v344 = vsel %vm336, -1e+16, %v295
    %vm345 = vcmask 64512
    %v346 = vsel %vm345, %v337, -inf
    %347 = vmax.xlane.f32.xlu0 %v346
    %v348 = vpop.xlane.xlu0 %347
    %v349 = vsel %vm345, %v338, -inf
    %350 = vmax.xlane.f32.xlu0 %v349
    %v351 = vpop.xlane.xlu0 %350
    %v352 = vsel %vm345, %v339, -inf
    %353 = vmax.xlane.f32.xlu0 %v352
    %v354 = vpop.xlane.xlu0 %353
    %v355 = vsel %vm345, %v340, -inf
    %356 = vmax.xlane.f32.xlu0 %v355
    %v357 = vpop.xlane.xlu0 %356
    %v358 = vsel %vm345, %v341, -inf
    %359 = vmax.xlane.f32.xlu0 %v358
    %v360 = vpop.xlane.xlu0 %359
    %v361 = vsel %vm345, %v342, -inf
    %362 = vmax.xlane.f32.xlu0 %v361
    %v363 = vpop.xlane.xlu0 %362
    %v364 = vsel %vm345, %v343, -inf
    %365 = vmax.xlane.f32.xlu0 %v364
    %v366 = vpop.xlane.xlu0 %365
    %v367 = vsel %vm345, %v344, -inf
    %368 = vmax.xlane.f32.xlu0 %v367
    %v369 = vpop.xlane.xlu0 %368
    %v370 = vsub.f32 %v337, %v348
    %v371 = vsub.f32 %v338, %v351
    %v372 = vsub.f32 %v339, %v354
    %v373 = vsub.f32 %v340, %v357
    %v374 = vsub.f32 %v341, %v360
    %v375 = vsub.f32 %v342, %v363
    %v376 = vsub.f32 %v343, %v366
    %v377 = vsub.f32 %v344, %v369
    %v378 = vmul.f32 %v370, 1.442695
    %v379 = vpow.pop %v378
    %v380 = vmul.f32 %v371, 1.442695
    %v381 = vpow.pop %v380
    %v382 = vmul.f32 %v372, 1.442695
    %v383 = vpow.pop %v382
    %v384 = vmul.f32 %v373, 1.442695
    %v385 = vpow.pop %v384
    %v386 = vmul.f32 %v374, 1.442695
    %v387 = vpow.pop %v386
    %v388 = vmul.f32 %v375, 1.442695
    %v389 = vpow.pop %v388
    %v390 = vmul.f32 %v376, 1.442695
    %v391 = vpow.pop %v390
    %v392 = vmul.f32 %v377, 1.442695
    %v393 = vpow.pop %v392
    %v394 = vsel %vm345, %v379, 0.0
    %395 = vadd.xlane.f32.xlu0 %v394
    %v396 = vpop.xlane.xlu0 %395
    %v397 = vsel %vm345, %v381, 0.0
    %398 = vadd.xlane.f32.xlu0 %v397
    %v399 = vpop.xlane.xlu0 %398
    %v400 = vsel %vm345, %v383, 0.0
    %401 = vadd.xlane.f32.xlu0 %v400
    %v402 = vpop.xlane.xlu0 %401
    %v403 = vsel %vm345, %v385, 0.0
    %404 = vadd.xlane.f32.xlu0 %v403
    %v405 = vpop.xlane.xlu0 %404
    %v406 = vsel %vm345, %v387, 0.0
    %407 = vadd.xlane.f32.xlu0 %v406
    %v408 = vpop.xlane.xlu0 %407
    %v409 = vsel %vm345, %v389, 0.0
    %410 = vadd.xlane.f32.xlu0 %v409
    %v411 = vpop.xlane.xlu0 %410
    %v412 = vsel %vm345, %v391, 0.0
    %413 = vadd.xlane.f32.xlu0 %v412
    %v414 = vpop.xlane.xlu0 %413
    %v415 = vsel %vm345, %v393, 0.0
    %416 = vadd.xlane.f32.xlu0 %v415
    %v417 = vpop.xlane.xlu0 %416
    %v418 = vrcp.pop %v396
    %v419 = vrcp.pop %v399
    %v420 = vrcp.pop %v402
    %v421 = vrcp.pop %v405
    %v422 = vrcp.pop %v408
    %v423 = vrcp.pop %v411
    %v424 = vrcp.pop %v414
    %v425 = vrcp.pop %v417
    %v426 = vmul.f32 %v379, %v418
    %v427 = vmul.f32 %v381, %v419
    %v428 = vmul.f32 %v383, %v420
    %v429 = vmul.f32 %v385, %v421
    %v430 = vmul.f32 %v387, %v422
    %v431 = vmul.f32 %v389, %v423
    %v432 = vmul.f32 %v391, %v424
    %v433 = vmul.f32 %v393, %v425
    %434 = vst.msk [vmem:[#allocation8] sm:$0xff] %vm345, %v426
    %435 = vst.msk [vmem:[#allocation8 + $0x8] sm:$0xff] %vm345, %v427
    %436 = vst.msk [vmem:[#allocation8 + $0x10] sm:$0xff] %vm345, %v428
    %437 = vst.msk [vmem:[#allocation8 + $0x18] sm:$0xff] %vm345, %v429
    %438 = vst.msk [vmem:[#allocation8 + $0x20] sm:$0xff] %vm345, %v430
    %439 = vst.msk [vmem:[#allocation8 + $0x28] sm:$0xff] %vm345, %v431
    %440 = vst.msk [vmem:[#allocation8 + $0x30] sm:$0xff] %vm345, %v432
    %441 = vst.msk [vmem:[#allocation8 + $0x38] sm:$0xff] %vm345, %v433
    // Predicated region
    $region26: #{tpu_custom_call.1} parent=1 // pred_check
      _
    $region27: #{tpu_custom_call.1} parent=1 // pred_check_branch
      %443 = sbr.rel (0) target = $region29
    $region28: #{tpu_custom_call.1} parent=1 // pred_region
      %445 = vsyncadd [#allocation4], 0
      %s446 = sshll.u32 [#allocation8], 4
      %s447 = int_to_ptr.vmem [resolvable:$true] %s446
      %s448 = sshll.u32 %s3, 4
      %s449 = int_to_ptr.hbm [resolvable:$true] %s448
      %454 = dma.vmem_to_hbm [thread:$0]  %s447, 1024, %s449, [#allocation4], 128, 128, 8
    $region29: #{tpu_custom_call.1} parent=1 // pred_fallthru
      _
    // Predicated region
    $region30: #{tpu_custom_call.1} parent=1 // pred_check
      _
    $region31: #{tpu_custom_call.1} parent=1 // pred_check_branch
      %456 = sbr.rel (0) target = $region33
    $region32: #{tpu_custom_call.1} parent=1 // pred_region
      %458 = dma.done [#allocation4], 1024
    $region33: #{tpu_custom_call.1} parent=1 // pred_fallthru
      _
    %459 = vsyncpa [#allocation3], 1
    %460 = vsyncpa [#allocation6], 1
    %461 = vsyncpa [#allocation4], 1

</llo_original>
